<compile_context>
chip_gen: v7x
topology: tpu7x:2x2x1
jax: 0.10.0
libtpu: 0.0.40
codegen_flags: <defaults>
</compile_context>

<pallas_src>
import functools

import jax
import jax.numpy as jnp
from jax.experimental import pallas as pl
from jax.experimental.pallas import tpu as pltpu


# ----------------------------------------------------------------------------- kernels
def _make_kernel(apply_mask: bool):
    def _compute(obs_ref, ids_ref, wr_ref, br_ref, w1s_ref, w1i_ref,
                 b1_ref, w2_ref, b2_ref):
        # representation: state = ReLU(obs @ Wr + br)
        state = jnp.dot(obs_ref[...], wr_ref[...], preferred_element_type=jnp.float32)
        state = jnp.maximum(state + br_ref[...], 0.0)
        # fused actor+critic hidden layer:
        #   h = ReLU([state, ids] @ [W1s; W1i] + b1), width = 2*hidden
        h = (jnp.dot(state, w1s_ref[...], preferred_element_type=jnp.float32)
             + jnp.dot(ids_ref[...], w1i_ref[...], preferred_element_type=jnp.float32)
             + b1_ref[...])
        h = jnp.maximum(h, 0.0)
        # fused block-diagonal output layer (lane-padded to 128):
        #   out[:, :A]   = logits,  out[:, A] = value,  out[:, A+1:] = 0
        return jnp.dot(h, w2_ref[...], preferred_element_type=jnp.float32) + b2_ref[...]

    if apply_mask:
        def kernel(obs_ref, ids_ref, mask_ref, wr_ref, br_ref, w1s_ref, w1i_ref,
                   b1_ref, w2_ref, b2_ref, out_ref):
            out = _compute(obs_ref, ids_ref, wr_ref, br_ref, w1s_ref, w1i_ref,
                           b1_ref, w2_ref, b2_ref)
            out_ref[...] = jnp.where(mask_ref[...] == 0, -1.0e10, out)
    else:
        def kernel(obs_ref, ids_ref, wr_ref, br_ref, w1s_ref, w1i_ref,
                   b1_ref, w2_ref, b2_ref, out_ref):
            out_ref[...] = _compute(obs_ref, ids_ref, wr_ref, br_ref, w1s_ref,
                                    w1i_ref, b1_ref, w2_ref, b2_ref)
    return kernel


# ----------------------------------------------------------------------------- launcher
def _tiling(batch, max_tile=512):
    """Pick a batch tile (multiple of 8, capped for v7x VMEM headroom)."""
    b8 = ((batch + 7) // 8) * 8
    tile_b = min(max_tile, b8)
    b_pad = ((b8 + tile_b - 1) // tile_b) * tile_b
    return tile_b, b_pad


def _pad_rows(x, rows):
    if x.shape[0] == rows:
        return x
    return jnp.pad(x, ((0, rows - x.shape[0]), (0, 0)))


@functools.partial(jax.jit, static_argnames=("tile_b",))
def _run_kernel(obs, ids, mask, fused, *, tile_b):
    B, obs_dim = obs.shape
    n_agents = ids.shape[1]
    rep_dim = fused["Wr"].shape[1]
    h2 = fused["W1s"].shape[1]
    P = fused["W2"].shape[1]
    apply_mask = mask is not None
    grid = (B // tile_b,)

    def row_spec(feat):
        return pl.BlockSpec((tile_b, feat), lambda i: (i, 0))

    def const_spec(arr):
        return pl.BlockSpec(arr.shape, lambda i: (0, 0))

    weights = (fused["Wr"], fused["br"], fused["W1s"], fused["W1i"],
               fused["b1"], fused["W2"], fused["b2"])

    in_specs = [row_spec(obs_dim), row_spec(n_agents)]
    args = [obs, ids]
    if apply_mask:
        in_specs.append(row_spec(P))
        args.append(mask)
    in_specs += [const_spec(w) for w in weights]
    args += list(weights)

    flops = 2 * B * (obs_dim * rep_dim + rep_dim * h2 + n_agents * h2 + h2 * P)
    bytes_accessed = 4 * (B * (obs_dim + n_agents + P + (P if apply_mask else 0))
                          + sum(int(w.size) for w in weights))

    out = pl.pallas_call(
        _make_kernel(apply_mask),
        grid=grid,
        in_specs=in_specs,
        out_specs=pl.BlockSpec((tile_b, P), lambda i: (i, 0)),
        out_shape=jax.ShapeDtypeStruct((B, P), jnp.float32),
        compiler_params=pltpu.CompilerParams(
            dimension_semantics=("parallel",),
            vmem_limit_bytes=64 * 1024 * 1024),
        cost_estimate=pl.CostEstimate(
            flops=flops, transcendentals=0, bytes_accessed=bytes_accessed),
    )(*args)
    return out


# ----------------------------------------------------------------------------- params
def make_params(key, obs_dim, rep_dim, n_agents, hidden, action_dim):
    ks = jax.random.split(key, 8)
    scale = 0.1
    return {
        "Wr": scale * jax.random.normal(ks[0], (obs_dim, rep_dim), jnp.float32),
        "br": jnp.zeros((1, rep_dim), jnp.float32),
        # actor layer 1, split across the [state, agent_ids] concat
        "Wa1_state": scale * jax.random.normal(ks[1], (rep_dim, hidden), jnp.float32),
        "Wa1_id": scale * jax.random.normal(ks[2], (n_agents, hidden), jnp.float32),
        "ba1": jnp.zeros((1, hidden), jnp.float32),
        "Wa2": scale * jax.random.normal(ks[3], (hidden, action_dim), jnp.float32),
        "ba2": jnp.zeros((1, action_dim), jnp.float32),
        # critic layer 1, split across the [state, agent_ids] concat
        "Wc1_state": scale * jax.random.normal(ks[4], (rep_dim, hidden), jnp.float32),
        "Wc1_id": scale * jax.random.normal(ks[5], (n_agents, hidden), jnp.float32),
        "bc1": jnp.zeros((1, hidden), jnp.float32),
        "Wc2": scale * jax.random.normal(ks[6], (hidden, 1), jnp.float32),
        "bc2": jnp.zeros((1, 1), jnp.float32),
    }


def fuse_params(params, lane_pad=128):
    """Fuse actor/critic into a single 3-matmul network with a 128-lane output slab."""
    hidden = params["Wa2"].shape[0]
    action_dim = params["Wa2"].shape[1]
    P = ((action_dim + 1 + lane_pad - 1) // lane_pad) * lane_pad
    w1s = jnp.concatenate([params["Wa1_state"], params["Wc1_state"]], axis=1)
    w1i = jnp.concatenate([params["Wa1_id"], params["Wc1_id"]], axis=1)
    b1 = jnp.concatenate([params["ba1"], params["bc1"]], axis=1)
    w2 = jnp.zeros((2 * hidden, P), jnp.float32)
    w2 = w2.at[:hidden, :action_dim].set(params["Wa2"])
    w2 = w2.at[hidden:, action_dim].set(params["Wc2"][:, 0])
    b2 = jnp.zeros((1, P), jnp.float32)
    b2 = b2.at[:, :action_dim].set(params["ba2"])
    b2 = b2.at[:, action_dim].set(params["bc2"][0, 0])
    return {"Wr": params["Wr"], "br": params["br"],
            "W1s": w1s, "W1i": w1i, "b1": b1, "W2": w2, "b2": b2}


# ----------------------------------------------------------------------------- forward
def maac_policy_share_forward(fused_params, observation, agent_ids, action_dim,
                              avail_actions=None):
    """Mirrors MAAC_Policy_Share.forward (use_rnn=False, mixer=None).

    Returns (rnn_hidden, logits, values_tot): logits parameterize the
    CategoricalDistribution; values_tot has shape (B, n_agents, 1).
    """
    B = observation.shape[0]
    n_agents = agent_ids.shape[-1]
    P = fused_params["W2"].shape[1]
    tile_b, b_pad = _tiling(B)

    obs_p = _pad_rows(observation.astype(jnp.float32), b_pad)
    ids_p = _pad_rows(agent_ids.astype(jnp.float32), b_pad)

    if avail_actions is not None:
        # pad mask to the lane-dense output width; the value column and padded
        # lanes/rows are kept "available" (ones) so they are never masked.
        mask = jnp.ones((b_pad, P), jnp.float32)
        mask = mask.at[:B, :action_dim].set(avail_actions.astype(jnp.float32))
    else:
        mask = None

    out = _run_kernel(obs_p, ids_p, mask, fused_params, tile_b=tile_b)
    out = out[:B]
    logits = out[:, :action_dim]
    values_independent = out[:, action_dim:action_dim + 1]
    values_tot = jnp.broadcast_to(values_independent[:, None, :], (B, n_agents, 1))
    rnn_hidden = None  # TODO(synk): RNN (GRU/LSTM) representation path not implemented.
    return rnn_hidden, logits, values_tot


# ----------------------------------------------------------------------------- reference
def _reference_forward(params, obs, agent_ids):
    state = jnp.maximum(obs @ params["Wr"] + params["br"], 0.0)
    ha = jnp.maximum(
        state @ params["Wa1_state"] + agent_ids @ params["Wa1_id"] + params["ba1"], 0.0)
    logits = ha @ params["Wa2"] + params["ba2"]
    hc = jnp.maximum(
        state @ params["Wc1_state"] + agent_ids @ params["Wc1_id"] + params["bc1"], 0.0)
    values = hc @ params["Wc2"] + params["bc2"]
    return logits, values


if __name__ == "__main__":
    key = jax.random.PRNGKey(0)
    n_envs, n_agents = 2, 4
    batch = n_envs * n_agents          # parameter sharing: rows = env * agent
    obs_dim, rep_dim, hidden, action_dim = 16, 32, 32, 8

    k_obs, k_par = jax.random.split(key)
    observation = jax.random.normal(k_obs, (batch, obs_dim), jnp.float32)
    agent_ids = jnp.tile(jnp.eye(n_agents, dtype=jnp.float32), (n_envs, 1))

    params = make_params(k_par, obs_dim, rep_dim, n_agents, hidden, action_dim)
    fused = fuse_params(params)

    # --- unmasked path -------------------------------------------------------
    rnn_hidden, logits, values_tot = maac_policy_share_forward(
        fused, observation, agent_ids, action_dim, avail_actions=None)
    logits = jax.block_until_ready(logits)
    values_tot = jax.block_until_ready(values_tot)

    ref_logits, ref_values = _reference_forward(params, observation, agent_ids)
    ref_values_tot = jnp.broadcast_to(ref_values[:, None, :], (batch, n_agents, 1))
    assert logits.shape == (batch, action_dim)
    assert values_tot.shape == (batch, n_agents, 1)
    assert jnp.allclose(logits, ref_logits, atol=2e-3, rtol=2e-3)
    assert jnp.allclose(values_tot, ref_values_tot, atol=2e-3, rtol=2e-3)

    # --- masked (avail_actions) path, fused in-kernel ------------------------
    avail = (jax.random.uniform(jax.random.PRNGKey(1), (batch, action_dim)) > 0.3
             ).astype(jnp.float32)
    _, logits_m, _ = maac_policy_share_forward(
        fused, observation, agent_ids, action_dim, avail_actions=avail)
    logits_m = jax.block_until_ready(logits_m)
    ref_logits_m = jnp.where(avail == 0, -1.0e10, ref_logits)
    assert jnp.allclose(logits_m, ref_logits_m, atol=2e-3, rtol=2e-3)

    print("KERNEL_OK")
</pallas_src>

<mosaic_0001>
module attributes {stable_mosaic.version = 11 : i64} {
  func.func @kernel(%arg0: i32, %arg1: memref<8x16xf32, #tpu.memory_space<vmem>>, %arg2: memref<8x4xf32, #tpu.memory_space<vmem>>, %arg3: memref<16x32xf32, #tpu.memory_space<vmem>>, %arg4: memref<1x32xf32, #tpu.memory_space<vmem>>, %arg5: memref<32x64xf32, #tpu.memory_space<vmem>>, %arg6: memref<4x64xf32, #tpu.memory_space<vmem>>, %arg7: memref<1x64xf32, #tpu.memory_space<vmem>>, %arg8: memref<64x128xf32, #tpu.memory_space<vmem>>, %arg9: memref<1x128xf32, #tpu.memory_space<vmem>>, %arg10: memref<8x128xf32, #tpu.memory_space<vmem>>) attributes {dimension_semantics = [#tpu.dimension_semantics<parallel>], iteration_bounds = array<i64: 1>, scalar_prefetch = 0 : i64, scratch_operands = 0 : i64, tpu.core_type = #tpu.core_type<tc>, window_params = [{transform_indices = @transform_0, window_bounds = array<i64: 8, 16>}, {transform_indices = @transform_1, window_bounds = array<i64: 8, 4>}, {pipeline_mode = #tpu.pipeline_mode<synchronous>, transform_indices = @transform_2, window_bounds = array<i64: 16, 32>}, {pipeline_mode = #tpu.pipeline_mode<synchronous>, transform_indices = @transform_3, window_bounds = array<i64: 1, 32>}, {pipeline_mode = #tpu.pipeline_mode<synchronous>, transform_indices = @transform_4, window_bounds = array<i64: 32, 64>}, {pipeline_mode = #tpu.pipeline_mode<synchronous>, transform_indices = @transform_5, window_bounds = array<i64: 4, 64>}, {pipeline_mode = #tpu.pipeline_mode<synchronous>, transform_indices = @transform_6, window_bounds = array<i64: 1, 64>}, {pipeline_mode = #tpu.pipeline_mode<synchronous>, transform_indices = @transform_7, window_bounds = array<i64: 64, 128>}, {pipeline_mode = #tpu.pipeline_mode<synchronous>, transform_indices = @transform_8, window_bounds = array<i64: 1, 128>}, {transform_indices = @transform_9, window_bounds = array<i64: 8, 128>}]} {
    %c0 = arith.constant 0 : index
    %c0_0 = arith.constant 0 : index
    %0 = vector.load %arg1[%c0, %c0_0] : memref<8x16xf32, #tpu.memory_space<vmem>>, vector<8x16xf32>
    %c0_1 = arith.constant 0 : index
    %c0_2 = arith.constant 0 : index
    %1 = vector.load %arg3[%c0_1, %c0_2] : memref<16x32xf32, #tpu.memory_space<vmem>>, vector<16x32xf32>
    %cst = arith.constant dense<0.000000e+00> : vector<8x32xf32>
    %2 = tpu.matmul %0, %1, %cst {dimension_numbers = #tpu.dot_dimension_numbers<[1], [0], [0], [1], [0, 0, 1, 1], [], []>} : vector<8x16xf32>, vector<16x32xf32>, vector<8x32xf32> -> vector<8x32xf32>
    %c0_3 = arith.constant 0 : index
    %c0_4 = arith.constant 0 : index
    %3 = vector.load %arg4[%c0_3, %c0_4] : memref<1x32xf32, #tpu.memory_space<vmem>>, vector<1x32xf32>
    %4 = vector.broadcast %3 : vector<1x32xf32> to vector<8x32xf32>
    %5 = arith.addf %2, %4 : vector<8x32xf32>
    %cst_5 = arith.constant 0.000000e+00 : f32
    %6 = vector.broadcast %cst_5 : f32 to vector<8x32xf32>
    %7 = arith.maximumf %5, %6 : vector<8x32xf32>
    %c0_6 = arith.constant 0 : index
    %c0_7 = arith.constant 0 : index
    %8 = vector.load %arg5[%c0_6, %c0_7] : memref<32x64xf32, #tpu.memory_space<vmem>>, vector<32x64xf32>
    %cst_8 = arith.constant dense<0.000000e+00> : vector<8x64xf32>
    %9 = tpu.matmul %7, %8, %cst_8 {dimension_numbers = #tpu.dot_dimension_numbers<[1], [0], [0], [1], [0, 0, 1, 1], [], []>} : vector<8x32xf32>, vector<32x64xf32>, vector<8x64xf32> -> vector<8x64xf32>
    %c0_9 = arith.constant 0 : index
    %c0_10 = arith.constant 0 : index
    %10 = vector.load %arg2[%c0_9, %c0_10] : memref<8x4xf32, #tpu.memory_space<vmem>>, vector<8x4xf32>
    %c0_11 = arith.constant 0 : index
    %c0_12 = arith.constant 0 : index
    %11 = vector.load %arg6[%c0_11, %c0_12] : memref<4x64xf32, #tpu.memory_space<vmem>>, vector<4x64xf32>
    %cst_13 = arith.constant dense<0.000000e+00> : vector<8x64xf32>
    %12 = tpu.matmul %10, %11, %cst_13 {dimension_numbers = #tpu.dot_dimension_numbers<[1], [0], [0], [1], [0, 0, 1, 1], [], []>} : vector<8x4xf32>, vector<4x64xf32>, vector<8x64xf32> -> vector<8x64xf32>
    %13 = arith.addf %9, %12 : vector<8x64xf32>
    %c0_14 = arith.constant 0 : index
    %c0_15 = arith.constant 0 : index
    %14 = vector.load %arg7[%c0_14, %c0_15] : memref<1x64xf32, #tpu.memory_space<vmem>>, vector<1x64xf32>
    %15 = vector.broadcast %14 : vector<1x64xf32> to vector<8x64xf32>
    %16 = arith.addf %13, %15 : vector<8x64xf32>
    %cst_16 = arith.constant 0.000000e+00 : f32
    %17 = vector.broadcast %cst_16 : f32 to vector<8x64xf32>
    %18 = arith.maximumf %16, %17 : vector<8x64xf32>
    %c0_17 = arith.constant 0 : index
    %c0_18 = arith.constant 0 : index
    %19 = vector.load %arg8[%c0_17, %c0_18] : memref<64x128xf32, #tpu.memory_space<vmem>>, vector<64x128xf32>
    %cst_19 = arith.constant dense<0.000000e+00> : vector<8x128xf32>
    %20 = tpu.matmul %18, %19, %cst_19 {dimension_numbers = #tpu.dot_dimension_numbers<[1], [0], [0], [1], [0, 0, 1, 1], [], []>} : vector<8x64xf32>, vector<64x128xf32>, vector<8x128xf32> -> vector<8x128xf32>
    %c0_20 = arith.constant 0 : index
    %c0_21 = arith.constant 0 : index
    %21 = vector.load %arg9[%c0_20, %c0_21] : memref<1x128xf32, #tpu.memory_space<vmem>>, vector<1x128xf32>
    %22 = vector.broadcast %21 : vector<1x128xf32> to vector<8x128xf32>
    %23 = arith.addf %20, %22 : vector<8x128xf32>
    %c0_22 = arith.constant 0 : index
    %c0_23 = arith.constant 0 : index
    %24 = vector.load %arg10[%c0_22, %c0_23] : memref<8x128xf32, #tpu.memory_space<vmem>>, vector<8x128xf32>
    tpu.vector_store %arg10[%c0_22, %c0_23], %23 {strides = array<i32>} : memref<8x128xf32, #tpu.memory_space<vmem>>, vector<8x128xf32>,
    return
  }
  func.func @transform_0(%arg0: i32) -> (i32, i32) {
    %c0_i32 = arith.constant 0 : i32
    %c0_i32_0 = arith.constant 0 : i32
    return %arg0, %c0_i32 : i32, i32
  }
  func.func @transform_1(%arg0: i32) -> (i32, i32) {
    %c0_i32 = arith.constant 0 : i32
    %c0_i32_0 = arith.constant 0 : i32
    return %arg0, %c0_i32 : i32, i32
  }
  func.func @transform_2(%arg0: i32) -> (i32, i32) {
    %c0_i32 = arith.constant 0 : i32
    %c0_i32_0 = arith.constant 0 : i32
    %c0_i32_1 = arith.constant 0 : i32
    return %c0_i32, %c0_i32_0 : i32, i32
  }
  func.func @transform_3(%arg0: i32) -> (i32, i32) {
    %c0_i32 = arith.constant 0 : i32
    %c0_i32_0 = arith.constant 0 : i32
    %c0_i32_1 = arith.constant 0 : i32
    return %c0_i32, %c0_i32_0 : i32, i32
  }
  func.func @transform_4(%arg0: i32) -> (i32, i32) {
    %c0_i32 = arith.constant 0 : i32
    %c0_i32_0 = arith.constant 0 : i32
    %c0_i32_1 = arith.constant 0 : i32
    return %c0_i32, %c0_i32_0 : i32, i32
  }
  func.func @transform_5(%arg0: i32) -> (i32, i32) {
    %c0_i32 = arith.constant 0 : i32
    %c0_i32_0 = arith.constant 0 : i32
    %c0_i32_1 = arith.constant 0 : i32
    return %c0_i32, %c0_i32_0 : i32, i32
  }
  func.func @transform_6(%arg0: i32) -> (i32, i32) {
    %c0_i32 = arith.constant 0 : i32
    %c0_i32_0 = arith.constant 0 : i32
    %c0_i32_1 = arith.constant 0 : i32
    return %c0_i32, %c0_i32_0 : i32, i32
  }
  func.func @transform_7(%arg0: i32) -> (i32, i32) {
    %c0_i32 = arith.constant 0 : i32
    %c0_i32_0 = arith.constant 0 : i32
    %c0_i32_1 = arith.constant 0 : i32
    return %c0_i32, %c0_i32_0 : i32, i32
  }
  func.func @transform_8(%arg0: i32) -> (i32, i32) {
    %c0_i32 = arith.constant 0 : i32
    %c0_i32_0 = arith.constant 0 : i32
    %c0_i32_1 = arith.constant 0 : i32
    return %c0_i32, %c0_i32_0 : i32, i32
  }
  func.func @transform_9(%arg0: i32) -> (i32, i32) {
    %c0_i32 = arith.constant 0 : i32
    %c0_i32_0 = arith.constant 0 : i32
    return %arg0, %c0_i32 : i32, i32
  }
}

</mosaic_0001>

<llo_original>
// kernel: _run_kernel.1
$region0: #{_run_kernel.1}
  #allocation0 [shape = 'u32[]', space=smem, size = 0x4, offset = 0x4, fixed_abs, tag = 'smem constant byte address 0x4 - core index']
  #allocation1 [shape = 'u32[144,128]{1,0:T(1,128)}', space=vmem, size = 0x12000, scoped, tag = 'internal scratch']
  %s0 = inlined_call_operand.hbm [shape: f32[8,16], index: 0, kind: input, shape index: {}]
  %s1 = inlined_call_operand.hbm [shape: f32[8,4], index: 1, kind: input, shape index: {}]
  %s2 = inlined_call_operand.hbm [shape: f32[16,32], index: 2, kind: input, shape index: {}]
  %s3 = inlined_call_operand.hbm [shape: f32[1,32], index: 3, kind: input, shape index: {}]
  %s4 = inlined_call_operand.hbm [shape: f32[32,64], index: 4, kind: input, shape index: {}]
  %s5 = inlined_call_operand.hbm [shape: f32[4,64], index: 5, kind: input, shape index: {}]
  %s6 = inlined_call_operand.hbm [shape: f32[1,64], index: 6, kind: input, shape index: {}]
  %s7 = inlined_call_operand.hbm [shape: f32[64,128], index: 7, kind: input, shape index: {}]
  %s8 = inlined_call_operand.hbm [shape: f32[1,128], index: 8, kind: input, shape index: {}]
  %s9 = inlined_call_operand.hbm [shape: f32[8,128], index: 9, kind: output, shape index: {}]
  %s10 = sld [smem:[#allocation0]]
  $region82: #{_run_kernel.1} parent=0
    _
  %s12 = ssub.s32 1, %s10
  %s13 = scalar_select 0, %s12, %s10
  $region1: #{_run_kernel.1} parent=0
    #allocation2 [shape = 'u8[4096]{0}', space=vmem, size = 0x1000, scoped, tag = 'input window, operand 0, single buffered']
    #allocation3 [shape = 's32[1]{0}', space=sflag, size = 0x4, scoped, tag = 'scoped memory for _run_kernel.1']
    #allocation4 [shape = 's32[1]{0}', space=sflag, size = 0x4, scoped, tag = 'scoped memory for _run_kernel.1']
    #allocation5 [shape = 'u8[4096]{0}', space=vmem, size = 0x1000, scoped, tag = 'input window, operand 1, single buffered']
    #allocation6 [shape = 's32[1]{0}', space=sflag, size = 0x4, scoped, tag = 'scoped memory for _run_kernel.1']
    #allocation7 [shape = 'u8[8192]{0}', space=vmem, size = 0x2000, scoped, tag = 'input window, operand 2, single buffered']
    #allocation8 [shape = 'u8[512]{0}', space=vmem, size = 0x400, scoped, tag = 'input window, operand 3, single buffered']
    #allocation9 [shape = 's32[1]{0}', space=sflag, size = 0x4, scoped, tag = 'scoped memory for _run_kernel.1']
    #allocation10 [shape = 'u8[16384]{0}', space=vmem, size = 0x4000, scoped, tag = 'input window, operand 4, single buffered']
    #allocation11 [shape = 'u8[2048]{0}', space=vmem, size = 0x800, scoped, tag = 'input window, operand 5, single buffered']
    #allocation12 [shape = 's32[1]{0}', space=sflag, size = 0x4, scoped, tag = 'scoped memory for _run_kernel.1']
    #allocation13 [shape = 'u8[512]{0}', space=vmem, size = 0x400, scoped, tag = 'input window, operand 6, single buffered']
    #allocation14 [shape = 'u8[32768]{0}', space=vmem, size = 0x8000, scoped, tag = 'input window, operand 7, single buffered']
    #allocation15 [shape = 's32[1]{0}', space=sflag, size = 0x4, scoped, tag = 'scoped memory for _run_kernel.1']
    #allocation16 [shape = 'u8[512]{0}', space=vmem, size = 0x400, scoped, tag = 'input window, operand 8, single buffered']
    #allocation17 [shape = 'u8[4096]{0}', space=vmem, size = 0x1000, scoped, tag = 'output window, operand 0, single buffered']
    %14 = vsyncpa [#allocation3], 0
    %15 = vsyncpa [#allocation6], 0
    %16 = vsyncpa [#allocation9], 0
    %17 = vsyncpa [#allocation12], 0
    %18 = vsyncpa [#allocation15], 0
    %19 = vsyncpa [#allocation4], 0
    // Predicated region
    $region2: #{_run_kernel.1} parent=1 // pred_check
      _
    $region3: #{_run_kernel.1} parent=1 // pred_check_branch
      %21 = sbr.rel (0) target = $region5
    $region4: #{_run_kernel.1} parent=1 // pred_region
      %s23 = ssub.s32 128, 128
      %24 = vsyncadd [#allocation3], %s23
      %s26 = sshll.u32 [#allocation2], 4
      %s27 = int_to_ptr.vmem [resolvable:$true] %s26
      %29 = dma.hbm_to_vmem [thread:$0]  %s0, 128, %s27, [#allocation3]
    $region5: #{_run_kernel.1} parent=1 // pred_fallthru
      _
    // Predicated region
    $region6: #{_run_kernel.1} parent=1 // pred_check
      _
    $region7: #{_run_kernel.1} parent=1 // pred_check_branch
      %31 = sbr.rel (0) target = $region9
    $region8: #{_run_kernel.1} parent=1 // pred_region
      %s33 = ssub.s32 128, 128
      %34 = vsyncadd [#allocation6], %s33
      %s36 = sshll.u32 [#allocation5], 4
      %s37 = int_to_ptr.vmem [resolvable:$true] %s36
      %39 = dma.hbm_to_vmem [thread:$0]  %s1, 128, %s37, [#allocation6]
    $region9: #{_run_kernel.1} parent=1 // pred_fallthru
      _
    // Predicated region
    $region10: #{_run_kernel.1} parent=1 // pred_check
      _
    $region11: #{_run_kernel.1} parent=1 // pred_check_branch
      %41 = sbr.rel (0) target = $region13
    $region12: #{_run_kernel.1} parent=1 // pred_region
      %s43 = ssub.s32 256, 256
      %44 = vsyncadd [#allocation6], %s43
      %s45 = sshll.u32 [#allocation7], 4
      %s46 = int_to_ptr.vmem [resolvable:$true] %s45
      %51 = dma.hbm_to_vmem [thread:$0]  %s2, 256, %s46, [#allocation6], 128, 128, 8
    $region13: #{_run_kernel.1} parent=1 // pred_fallthru
      _
    // Predicated region
    $region14: #{_run_kernel.1} parent=1 // pred_check
      _
    $region15: #{_run_kernel.1} parent=1 // pred_check_branch
      %53 = sbr.rel (0) target = $region17
    $region16: #{_run_kernel.1} parent=1 // pred_region
      %s55 = ssub.s32 16, 16
      %56 = vsyncadd [#allocation9], %s55
      %s58 = sshll.u32 [#allocation8], 4
      %s59 = int_to_ptr.vmem [resolvable:$true] %s58
      %61 = dma.hbm_to_vmem [thread:$0]  %s3, 16, %s59, [#allocation9]
    $region17: #{_run_kernel.1} parent=1 // pred_fallthru
      _
    // Predicated region
    $region18: #{_run_kernel.1} parent=1 // pred_check
      _
    $region19: #{_run_kernel.1} parent=1 // pred_check_branch
      %63 = sbr.rel (0) target = $region21
    $region20: #{_run_kernel.1} parent=1 // pred_region
      %s65 = ssub.s32 512, 512
      %66 = vsyncadd [#allocation9], %s65
      %s67 = sshll.u32 [#allocation10], 4
      %s68 = int_to_ptr.vmem [resolvable:$true] %s67
      %73 = dma.hbm_to_vmem [thread:$0]  %s4, 512, %s68, [#allocation9], 128, 128, 8
    $region21: #{_run_kernel.1} parent=1 // pred_fallthru
      _
    // Predicated region
    $region22: #{_run_kernel.1} parent=1 // pred_check
      _
    $region23: #{_run_kernel.1} parent=1 // pred_check_branch
      %75 = sbr.rel (0) target = $region25
    $region24: #{_run_kernel.1} parent=1 // pred_region
      %s77 = ssub.s32 64, 64
      %78 = vsyncadd [#allocation12], %s77
      %s80 = sshll.u32 [#allocation11], 4
      %s81 = int_to_ptr.vmem [resolvable:$true] %s80
      %83 = dma.hbm_to_vmem [thread:$0]  %s5, 64, %s81, [#allocation12]
    $region25: #{_run_kernel.1} parent=1 // pred_fallthru
      _
    // Predicated region
    $region26: #{_run_kernel.1} parent=1 // pred_check
      _
    $region27: #{_run_kernel.1} parent=1 // pred_check_branch
      %85 = sbr.rel (0) target = $region29
    $region28: #{_run_kernel.1} parent=1 // pred_region
      %s87 = ssub.s32 16, 16
      %88 = vsyncadd [#allocation12], %s87
      %s90 = sshll.u32 [#allocation13], 4
      %s91 = int_to_ptr.vmem [resolvable:$true] %s90
      %93 = dma.hbm_to_vmem [thread:$0]  %s6, 16, %s91, [#allocation12]
    $region29: #{_run_kernel.1} parent=1 // pred_fallthru
      _
    // Predicated region
    $region30: #{_run_kernel.1} parent=1 // pred_check
      _
    $region31: #{_run_kernel.1} parent=1 // pred_check_branch
      %95 = sbr.rel (0) target = $region33
    $region32: #{_run_kernel.1} parent=1 // pred_region
      %s97 = ssub.s32 1024, 1024
      %98 = vsyncadd [#allocation15], %s97
      %s99 = sshll.u32 [#allocation14], 4
      %s100 = int_to_ptr.vmem [resolvable:$true] %s99
      %105 = dma.hbm_to_vmem [thread:$0]  %s7, 1024, %s100, [#allocation15], 128, 128, 8
    $region33: #{_run_kernel.1} parent=1 // pred_fallthru
      _
    // Predicated region
    $region34: #{_run_kernel.1} parent=1 // pred_check
      _
    $region35: #{_run_kernel.1} parent=1 // pred_check_branch
      %107 = sbr.rel (0) target = $region37
    $region36: #{_run_kernel.1} parent=1 // pred_region
      %s109 = ssub.s32 16, 16
      %110 = vsyncadd [#allocation15], %s109
      %s112 = sshll.u32 [#allocation16], 4
      %s113 = int_to_ptr.vmem [resolvable:$true] %s112
      %115 = dma.hbm_to_vmem [thread:$0]  %s8, 16, %s113, [#allocation15]
    $region37: #{_run_kernel.1} parent=1 // pred_fallthru
      _
    // Predicated region
    $region38: #{_run_kernel.1} parent=1 // pred_check
      _
    $region39: #{_run_kernel.1} parent=1 // pred_check_branch
      %117 = sbr.rel (0) target = $region41
    $region40: #{_run_kernel.1} parent=1 // pred_region
      %118 = dma.done [#allocation3], 128
    $region41: #{_run_kernel.1} parent=1 // pred_fallthru
      _
    // Predicated region
    $region42: #{_run_kernel.1} parent=1 // pred_check
      _
    $region43: #{_run_kernel.1} parent=1 // pred_check_branch
      %120 = sbr.rel (0) target = $region45
    $region44: #{_run_kernel.1} parent=1 // pred_region
      %121 = dma.done [#allocation6], 128
    $region45: #{_run_kernel.1} parent=1 // pred_fallthru
      _
    // Predicated region
    $region46: #{_run_kernel.1} parent=1 // pred_check
      _
    $region47: #{_run_kernel.1} parent=1 // pred_check_branch
      %123 = sbr.rel (0) target = $region49
    $region48: #{_run_kernel.1} parent=1 // pred_region
      %124 = dma.done [#allocation6], 256
    $region49: #{_run_kernel.1} parent=1 // pred_fallthru
      _
    // Predicated region
    $region50: #{_run_kernel.1} parent=1 // pred_check
      _
    $region51: #{_run_kernel.1} parent=1 // pred_check_branch
      %126 = sbr.rel (0) target = $region53
    $region52: #{_run_kernel.1} parent=1 // pred_region
      %127 = dma.done [#allocation9], 16
    $region53: #{_run_kernel.1} parent=1 // pred_fallthru
      _
    // Predicated region
    $region54: #{_run_kernel.1} parent=1 // pred_check
      _
    $region55: #{_run_kernel.1} parent=1 // pred_check_branch
      %129 = sbr.rel (0) target = $region57
    $region56: #{_run_kernel.1} parent=1 // pred_region
      %130 = dma.done [#allocation9], 512
    $region57: #{_run_kernel.1} parent=1 // pred_fallthru
      _
    // Predicated region
    $region58: #{_run_kernel.1} parent=1 // pred_check
      _
    $region59: #{_run_kernel.1} parent=1 // pred_check_branch
      %132 = sbr.rel (0) target = $region61
    $region60: #{_run_kernel.1} parent=1 // pred_region
      %133 = dma.done [#allocation12], 64
    $region61: #{_run_kernel.1} parent=1 // pred_fallthru
      _
    // Predicated region
    $region62: #{_run_kernel.1} parent=1 // pred_check
      _
    $region63: #{_run_kernel.1} parent=1 // pred_check_branch
      %135 = sbr.rel (0) target = $region65
    $region64: #{_run_kernel.1} parent=1 // pred_region
      %136 = dma.done [#allocation12], 16
    $region65: #{_run_kernel.1} parent=1 // pred_fallthru
      _
    // Predicated region
    $region66: #{_run_kernel.1} parent=1 // pred_check
      _
    $region67: #{_run_kernel.1} parent=1 // pred_check_branch
      %138 = sbr.rel (0) target = $region69
    $region68: #{_run_kernel.1} parent=1 // pred_region
      %139 = dma.done [#allocation15], 1024
    $region69: #{_run_kernel.1} parent=1 // pred_fallthru
      _
    // Predicated region
    $region70: #{_run_kernel.1} parent=1 // pred_check
      _
    $region71: #{_run_kernel.1} parent=1 // pred_check_branch
      %141 = sbr.rel (0) target = $region73
    $region72: #{_run_kernel.1} parent=1 // pred_region
      %142 = dma.done [#allocation15], 16
    $region73: #{_run_kernel.1} parent=1 // pred_fallthru
      _
    %v143 = vld [vmem:[#allocation2] sm:$0xff]
    %v144 = vld [vmem:[#allocation7] sm:$0xff]
    %v145 = vld [vmem:[#allocation7 + $0x8] sm:$0xff]
    %v146 = vld [vmem:[#allocation8] sm:$0x1]
    %v148 = vlaneseq
    %v149 = vshrl.u32 %v148, 7
    %v150 = vsub.s32 0, %v149
    %v151 = vrot.slane %v146, %v150
    %vm153 = vcmask 130048
    %v155 = vsel %vm153, %v143, 0
    %157 = vmatprep.subr.mxu0 0.0
    %158 = vmatpush1.msra.mxu0 %v144
    %159 = vmatprep.subr.mxu0 0.0
    %160 = vmatpush1.msra.mxu0 %v145
    %161 = vmatprep.subr.mxu0 0.0
    %162 = vmatpush1.msra.mxu0 0.0
    %163 = vmatprep.subr.mxu0 0.0
    %164 = vmatpush1.msra.mxu0 0.0
    %165 = vmatprep.subr.mxu0 0.0
    %166 = vmatpush1.msra.mxu0 0.0
    %167 = vmatprep.subr.mxu0 0.0
    %168 = vmatpush1.msra.mxu0 0.0
    %169 = vmatprep.subr.mxu0 0.0
    %170 = vmatpush1.msra.mxu0 0.0
    %171 = vmatprep.subr.mxu0 0.0
    %172 = vmatpush1.msra.mxu0 0.0
    %173 = vmatprep.subr.mxu0 0.0
    %174 = vmatpush1.msra.mxu0 0.0
    %175 = vmatprep.subr.mxu0 0.0
    %176 = vmatpush1.msra.mxu0 0.0
    %177 = vmatprep.subr.mxu0 0.0
    %178 = vmatpush1.msra.mxu0 0.0
    %179 = vmatprep.subr.mxu0 0.0
    %180 = vmatpush1.msra.mxu0 0.0
    %181 = vmatprep.subr.mxu0 0.0
    %182 = vmatpush1.msra.mxu0 0.0
    %183 = vmatprep.subr.mxu0 0.0
    %184 = vmatpush1.msra.mxu0 0.0
    %185 = vmatprep.subr.mxu0 0.0
    %186 = vmatpush1.msra.mxu0 0.0
    %187 = vmatprep.subr.mxu0 0.0
    %188 = vmatpush1.msra.mxu0 0.0
    %189 = vmatprep.subr.mxu0 0.0
    %190 = vmatpush1.msra.mxu0 0.0
    %191 = vmatprep.subr.mxu0 0.0
    %192 = vmatpush1.msra.mxu0 0.0
    %193 = vmatprep.subr.mxu0 0.0
    %194 = vmatpush1.msra.mxu0 0.0
    %195 = vmatprep.subr.mxu0 0.0
    %196 = vmatpush1.msra.mxu0 0.0
    %197 = vmatprep.subr.mxu0 0.0
    %198 = vmatpush1.msra.mxu0 0.0
    %199 = vmatprep.subr.mxu0 0.0
    %200 = vmatpush1.msra.mxu0 0.0
    %201 = vmatprep.subr.mxu0 0.0
    %202 = vmatpush1.msra.mxu0 0.0
    %203 = vmatprep.subr.mxu0 0.0
    %204 = vmatpush1.msra.mxu0 0.0
    %205 = vmatprep.subr.mxu0 0.0
    %206 = vmatpush1.msra.mxu0 0.0
    %207 = vmatprep.subr.mxu0 0.0
    %208 = vmatpush1.msra.mxu0 0.0
    %209 = vmatprep.subr.mxu0 0.0
    %210 = vmatpush1.msra.mxu0 0.0
    %211 = vmatprep.subr.mxu0 0.0
    %212 = vmatpush1.msra.mxu0 0.0
    %213 = vmatprep.subr.mxu0 0.0
    %214 = vmatpush1.msra.mxu0 0.0
    %215 = vmatprep.subr.mxu0 0.0
    %216 = vmatpush1.msra.mxu0 0.0
    %217 = vmatprep.subr.mxu0 0.0
    %218 = vmatpush1.msra.mxu0 0.0
    %219 = vmatprep.subr.mxu0 0.0
    %220 = vmatpush1.msra.mxu0 0.0
    %221 = vmatprep.mubr.f32.mxu0 0.0
    %222 = vmatmul.mubr.f32.gmra.mrb[0].mxu0 %v155
    %v223 = vpop.f32.mrb[0].mxu0
    %v224 = vadd.f32 %v151, %v223
    %v225 = vpop.f32.mrb[0].mxu0
    %226 = vdwg.mxu0
    %v227 = vmax.f32 %v224, 0.0
    %v228 = vld [vmem:[#allocation10] sm:$0xff]
    %v229 = vld [vmem:[#allocation10 + $0x8] sm:$0xff]
    %v230 = vld [vmem:[#allocation10 + $0x10] sm:$0xff]
    %v231 = vld [vmem:[#allocation10 + $0x18] sm:$0xff]
    %v232 = vld [vmem:[#allocation5] sm:$0xff]
    %v233 = vld [vmem:[#allocation11] sm:$0xf]
    %vm234 = vcmask 31744
    %v236 = vsel %vm234, %v232, 0
    %vm238 = vcmask 1043456
    %v240 = vsel %vm238, %v233, 0
    %242 = vmatprep.subr.mxu0 0.0
    %243 = vmatpush1.msra.mxu0 %v240
    %244 = vmatprep.subr.mxu0 0.0
    %245 = vmatpush1.msra.mxu0 0.0
    %246 = vmatprep.subr.mxu0 0.0
    %247 = vmatpush1.msra.mxu0 0.0
    %248 = vmatprep.subr.mxu0 0.0
    %249 = vmatpush1.msra.mxu0 0.0
    %250 = vmatprep.subr.mxu0 0.0
    %251 = vmatpush1.msra.mxu0 0.0
    %252 = vmatprep.subr.mxu0 0.0
    %253 = vmatpush1.msra.mxu0 0.0
    %254 = vmatprep.subr.mxu0 0.0
    %255 = vmatpush1.msra.mxu0 0.0
    %256 = vmatprep.subr.mxu0 0.0
    %257 = vmatpush1.msra.mxu0 0.0
    %258 = vmatprep.subr.mxu0 0.0
    %259 = vmatpush1.msra.mxu0 0.0
    %260 = vmatprep.subr.mxu0 0.0
    %261 = vmatpush1.msra.mxu0 0.0
    %262 = vmatprep.subr.mxu0 0.0
    %263 = vmatpush1.msra.mxu0 0.0
    %264 = vmatprep.subr.mxu0 0.0
    %265 = vmatpush1.msra.mxu0 0.0
    %266 = vmatprep.subr.mxu0 0.0
    %267 = vmatpush1.msra.mxu0 0.0
    %268 = vmatprep.subr.mxu0 0.0
    %269 = vmatpush1.msra.mxu0 0.0
    %270 = vmatprep.subr.mxu0 0.0
    %271 = vmatpush1.msra.mxu0 0.0
    %272 = vmatprep.subr.mxu0 0.0
    %273 = vmatpush1.msra.mxu0 0.0
    %274 = vmatprep.subr.mxu0 0.0
    %275 = vmatpush1.msra.mxu0 0.0
    %276 = vmatprep.subr.mxu0 0.0
    %277 = vmatpush1.msra.mxu0 0.0
    %278 = vmatprep.subr.mxu0 0.0
    %279 = vmatpush1.msra.mxu0 0.0
    %280 = vmatprep.subr.mxu0 0.0
    %281 = vmatpush1.msra.mxu0 0.0
    %282 = vmatprep.subr.mxu0 0.0
    %283 = vmatpush1.msra.mxu0 0.0
    %284 = vmatprep.subr.mxu0 0.0
    %285 = vmatpush1.msra.mxu0 0.0
    %286 = vmatprep.subr.mxu0 0.0
    %287 = vmatpush1.msra.mxu0 0.0
    %288 = vmatprep.subr.mxu0 0.0
    %289 = vmatpush1.msra.mxu0 0.0
    %290 = vmatprep.subr.mxu0 0.0
    %291 = vmatpush1.msra.mxu0 0.0
    %292 = vmatprep.subr.mxu0 0.0
    %293 = vmatpush1.msra.mxu0 0.0
    %294 = vmatprep.subr.mxu0 0.0
    %295 = vmatpush1.msra.mxu0 0.0
    %296 = vmatprep.subr.mxu0 0.0
    %297 = vmatpush1.msra.mxu0 0.0
    %298 = vmatprep.subr.mxu0 0.0
    %299 = vmatpush1.msra.mxu0 0.0
    %300 = vmatprep.subr.mxu0 0.0
    %301 = vmatpush1.msra.mxu0 0.0
    %302 = vmatprep.subr.mxu0 0.0
    %303 = vmatpush1.msra.mxu0 0.0
    %304 = vmatprep.subr.mxu0 0.0
    %305 = vmatpush1.msra.mxu0 0.0
    %306 = vmatprep.mubr.f32.mxu0 0.0
    %307 = vmatmul.mubr.f32.gmra.mrb[0].mxu0 %v236
    %v308 = vpop.f32.mrb[0].mxu0
    %v309 = vadd.f32 0.0, %v308
    %v310 = vpop.f32.mrb[0].mxu0
    %311 = vdwg.mxu0
    %vm312 = vcmask 261120
    %v314 = vsel %vm312, %v227, 0
    %316 = vmatprep.subr.mxu0 0.0
    %317 = vmatpush1.msra.mxu0 %v228
    %318 = vmatprep.subr.mxu0 0.0
    %319 = vmatpush1.msra.mxu0 %v229
    %320 = vmatprep.subr.mxu0 0.0
    %321 = vmatpush1.msra.mxu0 %v230
    %322 = vmatprep.subr.mxu0 0.0
    %323 = vmatpush1.msra.mxu0 %v231
    %324 = vmatprep.subr.mxu0 0.0
    %325 = vmatpush1.msra.mxu0 0.0
    %326 = vmatprep.subr.mxu0 0.0
    %327 = vmatpush1.msra.mxu0 0.0
    %328 = vmatprep.subr.mxu0 0.0
    %329 = vmatpush1.msra.mxu0 0.0
    %330 = vmatprep.subr.mxu0 0.0
    %331 = vmatpush1.msra.mxu0 0.0
    %332 = vmatprep.subr.mxu0 0.0
    %333 = vmatpush1.msra.mxu0 0.0
    %334 = vmatprep.subr.mxu0 0.0
    %335 = vmatpush1.msra.mxu0 0.0
    %336 = vmatprep.subr.mxu0 0.0
    %337 = vmatpush1.msra.mxu0 0.0
    %338 = vmatprep.subr.mxu0 0.0
    %339 = vmatpush1.msra.mxu0 0.0
    %340 = vmatprep.subr.mxu0 0.0
    %341 = vmatpush1.msra.mxu0 0.0
    %342 = vmatprep.subr.mxu0 0.0
    %343 = vmatpush1.msra.mxu0 0.0
    %344 = vmatprep.subr.mxu0 0.0
    %345 = vmatpush1.msra.mxu0 0.0
    %346 = vmatprep.subr.mxu0 0.0
    %347 = vmatpush1.msra.mxu0 0.0
    %348 = vmatprep.subr.mxu0 0.0
    %349 = vmatpush1.msra.mxu0 0.0
    %350 = vmatprep.subr.mxu0 0.0
    %351 = vmatpush1.msra.mxu0 0.0
    %352 = vmatprep.subr.mxu0 0.0
    %353 = vmatpush1.msra.mxu0 0.0
    %354 = vmatprep.subr.mxu0 0.0
    %355 = vmatpush1.msra.mxu0 0.0
    %356 = vmatprep.subr.mxu0 0.0
    %357 = vmatpush1.msra.mxu0 0.0
    %358 = vmatprep.subr.mxu0 0.0
    %359 = vmatpush1.msra.mxu0 0.0
    %360 = vmatprep.subr.mxu0 0.0
    %361 = vmatpush1.msra.mxu0 0.0
    %362 = vmatprep.subr.mxu0 0.0
    %363 = vmatpush1.msra.mxu0 0.0
    %364 = vmatprep.subr.mxu0 0.0
    %365 = vmatpush1.msra.mxu0 0.0
    %366 = vmatprep.subr.mxu0 0.0
    %367 = vmatpush1.msra.mxu0 0.0
    %368 = vmatprep.subr.mxu0 0.0
    %369 = vmatpush1.msra.mxu0 0.0
    %370 = vmatprep.subr.mxu0 0.0
    %371 = vmatpush1.msra.mxu0 0.0
    %372 = vmatprep.subr.mxu0 0.0
    %373 = vmatpush1.msra.mxu0 0.0
    %374 = vmatprep.subr.mxu0 0.0
    %375 = vmatpush1.msra.mxu0 0.0
    %376 = vmatprep.subr.mxu0 0.0
    %377 = vmatpush1.msra.mxu0 0.0
    %378 = vmatprep.subr.mxu0 0.0
    %379 = vmatpush1.msra.mxu0 0.0
    %380 = vmatprep.mubr.f32.mxu0 0.0
    %381 = vmatmul.mubr.f32.gmra.mrb[0].mxu0 %v314
    %v382 = vpop.f32.mrb[0].mxu0
    %v383 = vadd.f32 %v309, %v382
    %v384 = vpop.f32.mrb[0].mxu0
    %385 = vdwg.mxu0
    %v386 = vld [vmem:[#allocation13] sm:$0x1]
    %v388 = vlaneseq
    %v389 = vshrl.u32 %v388, 7
    %v390 = vsub.s32 0, %v389
    %v391 = vrot.slane %v386, %v390
    %v393 = vadd.f32 %v383, %v391
    %v394 = vmax.f32 %v393, 0.0
    %v395 = vld [vmem:[#allocation14] sm:$0xff]
    %v396 = vld [vmem:[#allocation14 + $0x8] sm:$0xff]
    %v397 = vld [vmem:[#allocation14 + $0x10] sm:$0xff]
    %v398 = vld [vmem:[#allocation14 + $0x18] sm:$0xff]
    %v399 = vld [vmem:[#allocation14 + $0x20] sm:$0xff]
    %v400 = vld [vmem:[#allocation14 + $0x28] sm:$0xff]
    %v401 = vld [vmem:[#allocation14 + $0x30] sm:$0xff]
    %v402 = vld [vmem:[#allocation14 + $0x38] sm:$0xff]
    %v403 = vld [vmem:[#allocation16] sm:$0x1]
    %v405 = vlaneseq
    %v406 = vshrl.u32 %v405, 7
    %v407 = vsub.s32 0, %v406
    %v408 = vrot.slane %v403, %v407
    %vm410 = vcmask 523264
    %v412 = vsel %vm410, %v394, 0
    %414 = vmatprep.subr.mxu0 0.0
    %415 = vmatpush1.msra.mxu0 %v395
    %416 = vmatprep.subr.mxu0 0.0
    %417 = vmatpush1.msra.mxu0 %v396
    %418 = vmatprep.subr.mxu0 0.0
    %419 = vmatpush1.msra.mxu0 %v397
    %420 = vmatprep.subr.mxu0 0.0
    %421 = vmatpush1.msra.mxu0 %v398
    %422 = vmatprep.subr.mxu0 0.0
    %423 = vmatpush1.msra.mxu0 %v399
    %424 = vmatprep.subr.mxu0 0.0
    %425 = vmatpush1.msra.mxu0 %v400
    %426 = vmatprep.subr.mxu0 0.0
    %427 = vmatpush1.msra.mxu0 %v401
    %428 = vmatprep.subr.mxu0 0.0
    %429 = vmatpush1.msra.mxu0 %v402
    %430 = vmatprep.subr.mxu0 0.0
    %431 = vmatpush1.msra.mxu0 0.0
    %432 = vmatprep.subr.mxu0 0.0
    %433 = vmatpush1.msra.mxu0 0.0
    %434 = vmatprep.subr.mxu0 0.0
    %435 = vmatpush1.msra.mxu0 0.0
    %436 = vmatprep.subr.mxu0 0.0
    %437 = vmatpush1.msra.mxu0 0.0
    %438 = vmatprep.subr.mxu0 0.0
    %439 = vmatpush1.msra.mxu0 0.0
    %440 = vmatprep.subr.mxu0 0.0
    %441 = vmatpush1.msra.mxu0 0.0
    %442 = vmatprep.subr.mxu0 0.0
    %443 = vmatpush1.msra.mxu0 0.0
    %444 = vmatprep.subr.mxu0 0.0
    %445 = vmatpush1.msra.mxu0 0.0
    %446 = vmatprep.subr.mxu0 0.0
    %447 = vmatpush1.msra.mxu0 0.0
    %448 = vmatprep.subr.mxu0 0.0
    %449 = vmatpush1.msra.mxu0 0.0
    %450 = vmatprep.subr.mxu0 0.0
    %451 = vmatpush1.msra.mxu0 0.0
    %452 = vmatprep.subr.mxu0 0.0
    %453 = vmatpush1.msra.mxu0 0.0
    %454 = vmatprep.subr.mxu0 0.0
    %455 = vmatpush1.msra.mxu0 0.0
    %456 = vmatprep.subr.mxu0 0.0
    %457 = vmatpush1.msra.mxu0 0.0
    %458 = vmatprep.subr.mxu0 0.0
    %459 = vmatpush1.msra.mxu0 0.0
    %460 = vmatprep.subr.mxu0 0.0
    %461 = vmatpush1.msra.mxu0 0.0
    %462 = vmatprep.subr.mxu0 0.0
    %463 = vmatpush1.msra.mxu0 0.0
    %464 = vmatprep.subr.mxu0 0.0
    %465 = vmatpush1.msra.mxu0 0.0
    %466 = vmatprep.subr.mxu0 0.0
    %467 = vmatpush1.msra.mxu0 0.0
    %468 = vmatprep.subr.mxu0 0.0
    %469 = vmatpush1.msra.mxu0 0.0
    %470 = vmatprep.subr.mxu0 0.0
    %471 = vmatpush1.msra.mxu0 0.0
    %472 = vmatprep.subr.mxu0 0.0
    %473 = vmatpush1.msra.mxu0 0.0
    %474 = vmatprep.subr.mxu0 0.0
    %475 = vmatpush1.msra.mxu0 0.0
    %476 = vmatprep.subr.mxu0 0.0
    %477 = vmatpush1.msra.mxu0 0.0
    %478 = vmatprep.mubr.f32.mxu0 0.0
    %479 = vmatmul.mubr.f32.gmra.mrb[0].mxu0 %v412
    %v480 = vpop.f32.mrb[0].mxu0
    %v481 = vadd.f32 %v408, %v480
    %v482 = vpop.f32.mrb[0].mxu0
    %483 = vdwg.mxu0
    %484 = vst [vmem:[#allocation17] sm:$0xff] %v481
    // Predicated region
    $region74: #{_run_kernel.1} parent=1 // pred_check
      _
    $region75: #{_run_kernel.1} parent=1 // pred_check_branch
      %486 = sbr.rel (0) target = $region77
    $region76: #{_run_kernel.1} parent=1 // pred_region
      %s488 = ssub.s32 128, 128
      %489 = vsyncadd [#allocation4], %s488
      %s491 = sshll.u32 [#allocation17], 4
      %s492 = int_to_ptr.vmem [resolvable:$true] %s491
      %494 = dma.vmem_to_hbm [thread:$0]  %s492, 128, %s9, [#allocation4]
    $region77: #{_run_kernel.1} parent=1 // pred_fallthru
      _
    // Predicated region
    $region78: #{_run_kernel.1} parent=1 // pred_check
      _
    $region79: #{_run_kernel.1} parent=1 // pred_check_branch
      %496 = sbr.rel (0) target = $region81
    $region80: #{_run_kernel.1} parent=1 // pred_region
      %497 = dma.done [#allocation4], 128
    $region81: #{_run_kernel.1} parent=1 // pred_fallthru
      _
    %498 = vsyncpa [#allocation3], 1
    %499 = vsyncpa [#allocation6], 1
    %500 = vsyncpa [#allocation9], 1
    %501 = vsyncpa [#allocation12], 1
    %502 = vsyncpa [#allocation15], 1
    %503 = vsyncpa [#allocation4], 1

</llo_original>
